<compile_context>
chip_gen: v5e
topology: v5e:2x2
jax: 0.10.0
libtpu: 0.0.40
codegen_flags: <defaults>
</compile_context>

<pallas_src>
import jax
import jax.numpy as jnp
from jax.experimental import pallas as pl
from jax.experimental.pallas import tpu as pltpu


def concat_net_kernel(alpha_ref, x_ref, we_ref, be_ref, w12_ref, b12_ref, out_ref):
    # ---- embedding_net: flatten + linear ----
    # x arrives f32 (single HBM pass); cast to bf16 on the VPU under the DMA
    # shadow, accumulate in f32 on the MXU.
    x_bf = x_ref[...].astype(jnp.bfloat16)
    emb = jnp.dot(x_bf, we_ref[...],
                  preferred_element_type=jnp.float32) + be_ref[...]

    # ---- PReLU (single shared alpha, torch nn.PReLU() default), f32 VPU ----
    alpha = alpha_ref[0]
    act = jnp.where(emb > 0, emb, alpha * emb)

    # ---- folded fc1+fc2: emb_dim -> 3 (bf16 operands, f32 accumulation) ----
    logits = jnp.dot(act.astype(w12_ref.dtype), w12_ref[...],
                     preferred_element_type=jnp.float32) + b12_ref[...]

    # ---- log_softmax over last dim, f32 ----
    m = jnp.max(logits, axis=-1, keepdims=True)
    shifted = logits - m
    lse = jnp.log(jnp.sum(jnp.exp(shifted), axis=-1, keepdims=True))
    out_ref[...] = (shifted - lse).astype(out_ref.dtype)


def _choose_tile_and_vmem(B, in_features, emb_dim):
    """Pick the batch tile TB and an explicit scoped-VMEM limit.

    Budget: 2 buffers x (TB x in_features f32) for streamed x, 2 buffers x
    (TB x 3 -> 128-lane padded f32) for out, plus 2x the VMEM-resident weight
    blocks (constant index_maps, but BlockSpec inputs are double-buffered by
    default).  Capacity comes from the chip (v7x: 64 MiB, v5e/v6e: 128 MiB).
    """
    def rup(x, m):
        return ((x + m - 1) // m) * m

    try:
        vmem_cap = int(pltpu.get_tpu_info().vmem_capacity_bytes)
    except Exception:
        vmem_cap = 64 * 1024 * 1024  # conservative fallback = v7x per-TC capacity
    budget = vmem_cap // 2           # leave headroom for compiler scratch / regalloc

    # Resident weight blocks (bf16), padded to (sublane, 128) tiles.
    # TODO(synk): pin these to a single buffer (pipeline_mode=pl.Buffered(1))
    # once verified to lower cleanly; reclaims half of the weight VMEM.
    we_bytes = rup(in_features, 16) * rup(emb_dim, 128) * 2
    w12_bytes = rup(emb_dim, 16) * 128 * 2
    bias_bytes = 2 * (8 * 128 * 4)                 # be + b12, f32, (8,128) padded
    weights_total = 2 * (we_bytes + w12_bytes + bias_bytes)

    # Per-row streamed cost: double-buffered f32 x row + padded f32 out row.
    row_bytes = 2 * (rup(in_features, 128) * 4 + 128 * 4)
    tb_max = max(8, (budget - weights_total) // row_bytes)
    tb_cap = int(min(tb_max, 2048))                # >2048 rows: step cost already amortized
    if B <= tb_cap:
        TB = B                                     # full-extent block (no (8,128) constraint)
    else:
        TB = max(8, (tb_cap // 8) * 8)             # multiple of 8 sublanes (f32)

    needed = weights_total + TB * row_bytes
    vmem_limit = int(min(vmem_cap, max(needed + needed // 4 + (2 << 20), 16 << 20)))
    return TB, vmem_limit


def concatenation_net_forward(x_nchw, params):
    """x_nchw: (B, C, H, W) float32.  Returns log-softmax scores (B, 3) float32."""
    B = x_nchw.shape[0]
    x_flat = x_nchw.reshape(B, -1).astype(jnp.float32)   # torch .view flatten; stays f32
    in_features = x_flat.shape[1]

    we, be, alpha, w1, b1, w2, b2 = params
    emb_dim = we.shape[1]

    # Fold fc1/fc2 (no nonlinearity between them) on the host, in f32.
    w12 = w1 @ w2                                  # (emb_dim, 3)
    b12 = (b1 @ w2 + b2).astype(jnp.float32)       # (1, 3)

    # Weights (one-time conversion) in bf16 for the MXU; biases stay f32.
    we_bf = we.astype(jnp.bfloat16)
    w12_bf = w12.astype(jnp.bfloat16)
    be_f = be.astype(jnp.float32)
    alpha_s = alpha.reshape(1).astype(jnp.float32)  # SMEM scalar

    TB, vmem_limit = _choose_tile_and_vmem(B, in_features, emb_dim)
    grid = (pl.cdiv(B, TB),)

    def make_call(dim_sem):
        return pl.pallas_call(
            concat_net_kernel,
            out_shape=jax.ShapeDtypeStruct((B, 3), jnp.float32),
            grid=grid,
            in_specs=[
                # alpha: scalar in SMEM (avoids a padded (8,128) VMEM tile).
                pl.BlockSpec(memory_space=pltpu.MemorySpace.SMEM),
                # x: streamed f32 per batch tile (double-buffered by the pipeline).
                pl.BlockSpec((TB, in_features), lambda i: (i, 0)),
                # weights/biases: constant index_map -> VMEM-resident across iters.
                pl.BlockSpec((in_features, emb_dim), lambda i: (0, 0)),
                pl.BlockSpec((1, emb_dim), lambda i: (0, 0)),
                pl.BlockSpec((emb_dim, 3), lambda i: (0, 0)),
                pl.BlockSpec((1, 3), lambda i: (0, 0)),
            ],
            out_specs=pl.BlockSpec((TB, 3), lambda i: (i, 0)),
            compiler_params=pltpu.CompilerParams(
                dimension_semantics=dim_sem,
                vmem_limit_bytes=vmem_limit,
            ),
        )

    args = (alpha_s, x_flat, we_bf, be_f, w12_bf, b12)

    # v7x: CORE_PARALLEL actually shards the batch grid across the 2 TCs
    # ("parallel" does not change codegen).  Only worth trying with >1 grid
    # step; fall back to "parallel" if this chip / build rejects it
    # (v5e/v6e are single-core, so it would be a no-op there anyway).
    candidates = []
    if grid[0] > 1:
        candidates.append((pltpu.CORE_PARALLEL,))
    candidates.append(("parallel",))

    last_err = None
    for sem in candidates:
        try:
            return make_call(sem)(*args)
        except Exception as err:  # fallback to plain "parallel"
            last_err = err
    raise last_err


def make_params(key, in_features, emb_dim):
    """Deterministic synthetic parameters (shapes match the torch module)."""
    k = jax.random.split(key, 6)
    we = jax.random.normal(k[0], (in_features, emb_dim), jnp.float32) * 0.02
    be = jax.random.normal(k[1], (1, emb_dim), jnp.float32) * 0.02
    alpha = jnp.full((1, 1), 0.25, jnp.float32)        # nn.PReLU() default init
    w1 = jax.random.normal(k[2], (emb_dim, 256), jnp.float32) * 0.05
    b1 = jax.random.normal(k[3], (1, 256), jnp.float32) * 0.05
    w2 = jax.random.normal(k[4], (256, 3), jnp.float32) * 0.05
    b2 = jax.random.normal(k[5], (1, 3), jnp.float32) * 0.05
    return (we, be, alpha, w1, b1, w2, b2)


def reference_forward(x_nchw, params):
    """Pure-JAX f32 reference matching the PyTorch forward."""
    we, be, alpha, w1, b1, w2, b2 = params
    x = x_nchw.reshape(x_nchw.shape[0], -1)
    emb = x @ we + be
    act = jnp.where(emb > 0, emb, alpha[0, 0] * emb)
    h = act @ w1 + b1
    logits = h @ w2 + b2
    return jax.nn.log_softmax(logits, axis=-1)


if __name__ == "__main__":
    # Small shapes: batch=2, channels=4, spatial=16, embedding_dimension=32.
    B, C, H, W = 2, 4, 16, 16
    EMB_DIM = 32

    key = jax.random.PRNGKey(0)
    kx, kp = jax.random.split(key)
    x = jax.random.normal(kx, (B, C, H, W), jnp.float32)
    params = make_params(kp, C * H * W, EMB_DIM)

    scores = concatenation_net_forward(x, params)
    scores = jax.block_until_ready(scores)

    # Sanity: shape, normalization, and agreement with the f32 reference
    # (bf16 MXU operands -> loose tolerance).
    assert scores.shape == (B, 3)
    assert jnp.allclose(jnp.sum(jnp.exp(scores), axis=-1), 1.0, atol=1e-5)
    ref = reference_forward(x, params)
    assert jnp.allclose(scores, ref, atol=2e-2, rtol=2e-2)

    print("KERNEL_OK")
</pallas_src>

<mosaic_0001>
module attributes {stable_mosaic.version = 11 : i64} {
  func.func @concat_net_kernel(%arg0: i32, %arg1: memref<1xf32, #tpu.memory_space<smem>>, %arg2: memref<2x1024xf32, #tpu.memory_space<vmem>>, %arg3: memref<1024x32xbf16, #tpu.memory_space<vmem>>, %arg4: memref<1x32xf32, #tpu.memory_space<vmem>>, %arg5: memref<32x3xbf16, #tpu.memory_space<vmem>>, %arg6: memref<1x3xf32, #tpu.memory_space<vmem>>, %arg7: memref<2x3xf32, #tpu.memory_space<vmem>>) attributes {dimension_semantics = [#tpu.dimension_semantics<parallel>], iteration_bounds = array<i64: 1>, scalar_prefetch = 0 : i64, scratch_operands = 0 : i64, tpu.core_type = #tpu.core_type<tc>, window_params = [{transform_indices = @transform_0, window_bounds = array<i64: 1>}, {transform_indices = @transform_1, window_bounds = array<i64: 2, 1024>}, {pipeline_mode = #tpu.pipeline_mode<synchronous>, transform_indices = @transform_2, window_bounds = array<i64: 1024, 32>}, {pipeline_mode = #tpu.pipeline_mode<synchronous>, transform_indices = @transform_3, window_bounds = array<i64: 1, 32>}, {pipeline_mode = #tpu.pipeline_mode<synchronous>, transform_indices = @transform_4, window_bounds = array<i64: 32, 3>}, {pipeline_mode = #tpu.pipeline_mode<synchronous>, transform_indices = @transform_5, window_bounds = array<i64: 1, 3>}, {transform_indices = @transform_6, window_bounds = array<i64: 2, 3>}]} {
    %c0 = arith.constant 0 : index
    %c0_0 = arith.constant 0 : index
    %0 = vector.load %arg2[%c0, %c0_0] : memref<2x1024xf32, #tpu.memory_space<vmem>>, vector<2x1024xf32>
    %1 = arith.truncf %0 : vector<2x1024xf32> to vector<2x1024xbf16>
    %c0_1 = arith.constant 0 : index
    %c0_2 = arith.constant 0 : index
    %2 = vector.load %arg3[%c0_1, %c0_2] : memref<1024x32xbf16, #tpu.memory_space<vmem>>, vector<1024x32xbf16>
    %cst = arith.constant dense<0.000000e+00> : vector<2x32xf32>
    %3 = tpu.matmul %1, %2, %cst {dimension_numbers = #tpu.dot_dimension_numbers<[1], [0], [0], [1], [0, 0, 1, 1], [], []>} : vector<2x1024xbf16>, vector<1024x32xbf16>, vector<2x32xf32> -> vector<2x32xf32>
    %c0_3 = arith.constant 0 : index
    %c0_4 = arith.constant 0 : index
    %4 = vector.load %arg4[%c0_3, %c0_4] : memref<1x32xf32, #tpu.memory_space<vmem>>, vector<1x32xf32>
    %5 = vector.broadcast %4 : vector<1x32xf32> to vector<2x32xf32>
    %6 = arith.addf %3, %5 : vector<2x32xf32>
    %c0_5 = arith.constant 0 : index
    %7 = memref.load %arg1[%c0_5] : memref<1xf32, #tpu.memory_space<smem>>
    %cst_6 = arith.constant 0.000000e+00 : f32
    %8 = vector.broadcast %cst_6 : f32 to vector<2x32xf32>
    %9 = arith.cmpf ogt, %6, %8 : vector<2x32xf32>
    %10 = vector.broadcast %7 : f32 to vector<2x32xf32>
    %11 = arith.mulf %10, %6 : vector<2x32xf32>
    %12 = arith.select %9, %6, %11 : vector<2x32xi1>, vector<2x32xf32>
    %13 = arith.truncf %12 : vector<2x32xf32> to vector<2x32xbf16>
    %c0_7 = arith.constant 0 : index
    %c0_8 = arith.constant 0 : index
    %14 = vector.load %arg5[%c0_7, %c0_8] : memref<32x3xbf16, #tpu.memory_space<vmem>>, vector<32x3xbf16>
    %cst_9 = arith.constant dense<0.000000e+00> : vector<2x3xf32>
    %15 = tpu.matmul %13, %14, %cst_9 {dimension_numbers = #tpu.dot_dimension_numbers<[1], [0], [0], [1], [0, 0, 1, 1], [], []>} : vector<2x32xbf16>, vector<32x3xbf16>, vector<2x3xf32> -> vector<2x3xf32>
    %c0_10 = arith.constant 0 : index
    %c0_11 = arith.constant 0 : index
    %16 = vector.load %arg6[%c0_10, %c0_11] : memref<1x3xf32, #tpu.memory_space<vmem>>, vector<1x3xf32>
    %17 = vector.broadcast %16 : vector<1x3xf32> to vector<2x3xf32>
    %18 = arith.addf %15, %17 : vector<2x3xf32>
    %cst_12 = arith.constant dense<0xFF800000> : vector<2xf32>
    %19 = vector.multi_reduction <maximumf>, %18, %cst_12 [1] : vector<2x3xf32> to vector<2xf32>
    %20 = vector.shape_cast %19 : vector<2xf32> to vector<2x1xf32>
    %21 = vector.broadcast %20 : vector<2x1xf32> to vector<2x3xf32>
    %22 = arith.subf %18, %21 : vector<2x3xf32>
    %23 = math.exp %22 : vector<2x3xf32>
    %cst_13 = arith.constant dense<0.000000e+00> : vector<2xf32>
    %24 = vector.multi_reduction <add>, %23, %cst_13 [1] : vector<2x3xf32> to vector<2xf32>
    %25 = vector.shape_cast %24 : vector<2xf32> to vector<2x1xf32>
    %26 = math.log %25 : vector<2x1xf32>
    %27 = vector.broadcast %26 : vector<2x1xf32> to vector<2x3xf32>
    %28 = arith.subf %22, %27 : vector<2x3xf32>
    %c0_14 = arith.constant 0 : index
    %c0_15 = arith.constant 0 : index
    %29 = vector.load %arg7[%c0_14, %c0_15] : memref<2x3xf32, #tpu.memory_space<vmem>>, vector<2x3xf32>
    tpu.vector_store %arg7[%c0_14, %c0_15], %28 {strides = array<i32>} : memref<2x3xf32, #tpu.memory_space<vmem>>, vector<2x3xf32>,
    return
  }
  func.func @transform_0(%arg0: i32) -> i32 {
    %c0_i32 = arith.constant 0 : i32
    %c0_i32_0 = arith.constant 0 : i32
    return %c0_i32 : i32
  }
  func.func @transform_1(%arg0: i32) -> (i32, i32) {
    %c0_i32 = arith.constant 0 : i32
    %c0_i32_0 = arith.constant 0 : i32
    return %arg0, %c0_i32 : i32, i32
  }
  func.func @transform_2(%arg0: i32) -> (i32, i32) {
    %c0_i32 = arith.constant 0 : i32
    %c0_i32_0 = arith.constant 0 : i32
    %c0_i32_1 = arith.constant 0 : i32
    return %c0_i32, %c0_i32_0 : i32, i32
  }
  func.func @transform_3(%arg0: i32) -> (i32, i32) {
    %c0_i32 = arith.constant 0 : i32
    %c0_i32_0 = arith.constant 0 : i32
    %c0_i32_1 = arith.constant 0 : i32
    return %c0_i32, %c0_i32_0 : i32, i32
  }
  func.func @transform_4(%arg0: i32) -> (i32, i32) {
    %c0_i32 = arith.constant 0 : i32
    %c0_i32_0 = arith.constant 0 : i32
    %c0_i32_1 = arith.constant 0 : i32
    return %c0_i32, %c0_i32_0 : i32, i32
  }
  func.func @transform_5(%arg0: i32) -> (i32, i32) {
    %c0_i32 = arith.constant 0 : i32
    %c0_i32_0 = arith.constant 0 : i32
    %c0_i32_1 = arith.constant 0 : i32
    return %c0_i32, %c0_i32_0 : i32, i32
  }
  func.func @transform_6(%arg0: i32) -> (i32, i32) {
    %c0_i32 = arith.constant 0 : i32
    %c0_i32_0 = arith.constant 0 : i32
    return %arg0, %c0_i32 : i32, i32
  }
}

</mosaic_0001>

<llo_original>
// kernel: tpu_custom_call.1
$region0: #{tpu_custom_call.1}
  #allocation0 [shape = 'u32[]', space=smem, size = 0x4, offset = 0x4, fixed_abs, tag = 'smem constant byte address 0x4 - core index']
  #allocation1 [shape = 'u32[72,128]{1,0:T(1,128)}', space=vmem, size = 0x9000, scoped, tag = 'internal scratch']
  #allocation2 [shape = 'f32[1]{0:T(128)S(6)}', space=smem, size = 0x200, scoped, tag = 'scoped memory for tpu_custom_call.1']
  %s0 = inlined_call_operand.<no memory space> [shape: f32[1], index: 0, kind: input, shape index: {}]
  %s1 = inlined_call_operand.vmem [shape: f32[2,1024], index: 1, kind: input, shape index: {}]
  %s2 = inlined_call_operand.vmem [shape: bf16[1024,32], index: 2, kind: input, shape index: {}]
  %s3 = inlined_call_operand.vmem [shape: f32[1,32], index: 3, kind: input, shape index: {}]
  %s4 = inlined_call_operand.vmem [shape: bf16[32,3], index: 4, kind: input, shape index: {}]
  %s5 = inlined_call_operand.vmem [shape: f32[1,3], index: 5, kind: input, shape index: {}]
  %s6 = inlined_call_operand.hbm [shape: f32[2,3], index: 6, kind: output, shape index: {}]
  %s7 = sld [smem:[#allocation0]]
  $region34: #{tpu_custom_call.1} parent=0
    _
  %s9 = ssub.s32 1, %s7
  %s10 = scalar_select 0, %s9, %s7
  %11 = sst [smem:[#allocation2]] %s0
  $region1: #{tpu_custom_call.1} parent=0
    #allocation3 [shape = 'u8[1024]{0}', space=vmem, size = 0x400, scoped, tag = 'output window, operand 0, single buffered']
    #allocation4 [shape = 's32[1]{0}', space=sflag, size = 0x4, scoped, tag = 'scoped memory for tpu_custom_call.1']
    %12 = vsyncpa [#allocation4], 0
    // Predicated region
    $region2: #{tpu_custom_call.1} parent=1 // pred_check
      _
    $region3: #{tpu_custom_call.1} parent=1 // pred_check_branch
      %14 = sbr.rel (0) target = $region5
    $region4: #{tpu_custom_call.1} parent=1 // pred_region
      _
    $region5: #{tpu_custom_call.1} parent=1 // pred_fallthru
      _
    // Predicated region
    $region6: #{tpu_custom_call.1} parent=1 // pred_check
      _
    $region7: #{tpu_custom_call.1} parent=1 // pred_check_branch
      %16 = sbr.rel (0) target = $region9
    $region8: #{tpu_custom_call.1} parent=1 // pred_region
      _
    $region9: #{tpu_custom_call.1} parent=1 // pred_fallthru
      _
    // Predicated region
    $region10: #{tpu_custom_call.1} parent=1 // pred_check
      _
    $region11: #{tpu_custom_call.1} parent=1 // pred_check_branch
      %18 = sbr.rel (0) target = $region13
    $region12: #{tpu_custom_call.1} parent=1 // pred_region
      _
    $region13: #{tpu_custom_call.1} parent=1 // pred_fallthru
      _
    // Predicated region
    $region14: #{tpu_custom_call.1} parent=1 // pred_check
      _
    $region15: #{tpu_custom_call.1} parent=1 // pred_check_branch
      %20 = sbr.rel (0) target = $region17
    $region16: #{tpu_custom_call.1} parent=1 // pred_region
      _
    $region17: #{tpu_custom_call.1} parent=1 // pred_fallthru
      _
    // Predicated region
    $region18: #{tpu_custom_call.1} parent=1 // pred_check
      _
    $region19: #{tpu_custom_call.1} parent=1 // pred_check_branch
      %22 = sbr.rel (0) target = $region21
    $region20: #{tpu_custom_call.1} parent=1 // pred_region
      _
    $region21: #{tpu_custom_call.1} parent=1 // pred_fallthru
      _
    // Predicated region
    $region22: #{tpu_custom_call.1} parent=1 // pred_check
      _
    $region23: #{tpu_custom_call.1} parent=1 // pred_check_branch
      %24 = sbr.rel (0) target = $region25
    $region24: #{tpu_custom_call.1} parent=1 // pred_region
      _
    $region25: #{tpu_custom_call.1} parent=1 // pred_fallthru
      _
    %v26 = vld [vmem:[%s1] sm:$0xff]
    %v27 = vld [vmem:[%s1 + $0x8] sm:$0xff]
    %30 = vst [vmem:[#allocation1] ss:$4 sm:$0xff] %v26
    %s31 = scalar_lea.vmem [#allocation1], 32
    %32 = vst [vmem:[%s31] ss:$4 sm:$0xff] %v27
    %v33 = vld.sshfl [vmem:[#allocation1] sm:$0xff pattern:$0x73625140]
    %v34 = vld.sshfl [vmem:[#allocation1 + $0x8] sm:$0xff pattern:$0x73625140]
    %v35 = vld.sshfl [vmem:[#allocation1 + $0x10] sm:$0xff pattern:$0x73625140]
    %v36 = vld.sshfl [vmem:[#allocation1 + $0x18] sm:$0xff pattern:$0x73625140]
    %v37 = vld.sshfl [vmem:[#allocation1 + $0x20] sm:$0xff pattern:$0x73625140]
    %v38 = vld.sshfl [vmem:[#allocation1 + $0x28] sm:$0xff pattern:$0x73625140]
    %v39 = vld.sshfl [vmem:[#allocation1 + $0x30] sm:$0xff pattern:$0x73625140]
    %v40 = vld.sshfl [vmem:[#allocation1 + $0x38] sm:$0xff pattern:$0x73625140]
    %v49 = vpack.c.bf16 %v33, %v33
    %v50 = vpack.c.bf16 %v34, %v34
    %v51 = vpack.c.bf16 %v35, %v35
    %v52 = vpack.c.bf16 %v36, %v36
    %v53 = vpack.c.bf16 %v37, %v37
    %v54 = vpack.c.bf16 %v38, %v38
    %v55 = vpack.c.bf16 %v39, %v39
    %v56 = vpack.c.bf16 %v40, %v40
    %v57 = vld [vmem:[%s2] sm:$0xf]
    %v58 = vld [vmem:[%s2 + $0x4] sm:$0xf]
    %v59 = vld [vmem:[%s2 + $0x8] sm:$0xf]
    %v60 = vld [vmem:[%s2 + $0xc] sm:$0xf]
    %v61 = vld [vmem:[%s2 + $0x10] sm:$0xf]
    %v62 = vld [vmem:[%s2 + $0x14] sm:$0xf]
    %v63 = vld [vmem:[%s2 + $0x18] sm:$0xf]
    %v64 = vld [vmem:[%s2 + $0x1c] sm:$0xf]
    %v65 = vld [vmem:[%s2 + $0x20] sm:$0xf]
    %v66 = vld [vmem:[%s2 + $0x24] sm:$0xf]
    %v67 = vld [vmem:[%s2 + $0x28] sm:$0xf]
    %v68 = vld [vmem:[%s2 + $0x2c] sm:$0xf]
    %v69 = vld [vmem:[%s2 + $0x30] sm:$0xf]
    %v70 = vld [vmem:[%s2 + $0x34] sm:$0xf]
    %v71 = vld [vmem:[%s2 + $0x38] sm:$0xf]
    %v72 = vld [vmem:[%s2 + $0x3c] sm:$0xf]
    %v73 = vld [vmem:[%s2 + $0x40] sm:$0xf]
    %v74 = vld [vmem:[%s2 + $0x44] sm:$0xf]
    %v75 = vld [vmem:[%s2 + $0x48] sm:$0xf]
    %v76 = vld [vmem:[%s2 + $0x4c] sm:$0xf]
    %v77 = vld [vmem:[%s2 + $0x50] sm:$0xf]
    %v78 = vld [vmem:[%s2 + $0x54] sm:$0xf]
    %v79 = vld [vmem:[%s2 + $0x58] sm:$0xf]
    %v80 = vld [vmem:[%s2 + $0x5c] sm:$0xf]
    %v81 = vld [vmem:[%s2 + $0x60] sm:$0xf]
    %v82 = vld [vmem:[%s2 + $0x64] sm:$0xf]
    %v83 = vld [vmem:[%s2 + $0x68] sm:$0xf]
    %v84 = vld [vmem:[%s2 + $0x6c] sm:$0xf]
    %v85 = vld [vmem:[%s2 + $0x70] sm:$0xf]
    %v86 = vld [vmem:[%s2 + $0x74] sm:$0xf]
    %v87 = vld [vmem:[%s2 + $0x78] sm:$0xf]
    %v88 = vld [vmem:[%s2 + $0x7c] sm:$0xf]
    %v89 = vld [vmem:[%s2 + $0x80] sm:$0xf]
    %v90 = vld [vmem:[%s2 + $0x84] sm:$0xf]
    %v91 = vld [vmem:[%s2 + $0x88] sm:$0xf]
    %v92 = vld [vmem:[%s2 + $0x8c] sm:$0xf]
    %v93 = vld [vmem:[%s2 + $0x90] sm:$0xf]
    %v94 = vld [vmem:[%s2 + $0x94] sm:$0xf]
    %v95 = vld [vmem:[%s2 + $0x98] sm:$0xf]
    %v96 = vld [vmem:[%s2 + $0x9c] sm:$0xf]
    %v97 = vld [vmem:[%s2 + $0xa0] sm:$0xf]
    %v98 = vld [vmem:[%s2 + $0xa4] sm:$0xf]
    %v99 = vld [vmem:[%s2 + $0xa8] sm:$0xf]
    %v100 = vld [vmem:[%s2 + $0xac] sm:$0xf]
    %v101 = vld [vmem:[%s2 + $0xb0] sm:$0xf]
    %v102 = vld [vmem:[%s2 + $0xb4] sm:$0xf]
    %v103 = vld [vmem:[%s2 + $0xb8] sm:$0xf]
    %v104 = vld [vmem:[%s2 + $0xbc] sm:$0xf]
    %v105 = vld [vmem:[%s2 + $0xc0] sm:$0xf]
    %v106 = vld [vmem:[%s2 + $0xc4] sm:$0xf]
    %v107 = vld [vmem:[%s2 + $0xc8] sm:$0xf]
    %v108 = vld [vmem:[%s2 + $0xcc] sm:$0xf]
    %v109 = vld [vmem:[%s2 + $0xd0] sm:$0xf]
    %v110 = vld [vmem:[%s2 + $0xd4] sm:$0xf]
    %v111 = vld [vmem:[%s2 + $0xd8] sm:$0xf]
    %v112 = vld [vmem:[%s2 + $0xdc] sm:$0xf]
    %v113 = vld [vmem:[%s2 + $0xe0] sm:$0xf]
    %v114 = vld [vmem:[%s2 + $0xe4] sm:$0xf]
    %v115 = vld [vmem:[%s2 + $0xe8] sm:$0xf]
    %v116 = vld [vmem:[%s2 + $0xec] sm:$0xf]
    %v117 = vld [vmem:[%s2 + $0xf0] sm:$0xf]
    %v118 = vld [vmem:[%s2 + $0xf4] sm:$0xf]
    %v119 = vld [vmem:[%s2 + $0xf8] sm:$0xf]
    %v120 = vld [vmem:[%s2 + $0xfc] sm:$0xf]
    %v121 = vld [vmem:[%s2 + $0x100] sm:$0xf]
    %v122 = vld [vmem:[%s2 + $0x104] sm:$0xf]
    %v123 = vld [vmem:[%s2 + $0x108] sm:$0xf]
    %v124 = vld [vmem:[%s2 + $0x10c] sm:$0xf]
    %v125 = vld [vmem:[%s2 + $0x110] sm:$0xf]
    %v126 = vld [vmem:[%s2 + $0x114] sm:$0xf]
    %v127 = vld [vmem:[%s2 + $0x118] sm:$0xf]
    %v128 = vld [vmem:[%s2 + $0x11c] sm:$0xf]
    %v129 = vld [vmem:[%s2 + $0x120] sm:$0xf]
    %v130 = vld [vmem:[%s2 + $0x124] sm:$0xf]
    %v131 = vld [vmem:[%s2 + $0x128] sm:$0xf]
    %v132 = vld [vmem:[%s2 + $0x12c] sm:$0xf]
    %v133 = vld [vmem:[%s2 + $0x130] sm:$0xf]
    %v134 = vld [vmem:[%s2 + $0x134] sm:$0xf]
    %v135 = vld [vmem:[%s2 + $0x138] sm:$0xf]
    %v136 = vld [vmem:[%s2 + $0x13c] sm:$0xf]
    %v137 = vld [vmem:[%s2 + $0x140] sm:$0xf]
    %v138 = vld [vmem:[%s2 + $0x144] sm:$0xf]
    %v139 = vld [vmem:[%s2 + $0x148] sm:$0xf]
    %v140 = vld [vmem:[%s2 + $0x14c] sm:$0xf]
    %v141 = vld [vmem:[%s2 + $0x150] sm:$0xf]
    %v142 = vld [vmem:[%s2 + $0x154] sm:$0xf]
    %v143 = vld [vmem:[%s2 + $0x158] sm:$0xf]
    %v144 = vld [vmem:[%s2 + $0x15c] sm:$0xf]
    %v145 = vld [vmem:[%s2 + $0x160] sm:$0xf]
    %v146 = vld [vmem:[%s2 + $0x164] sm:$0xf]
    %v147 = vld [vmem:[%s2 + $0x168] sm:$0xf]
    %v148 = vld [vmem:[%s2 + $0x16c] sm:$0xf]
    %v149 = vld [vmem:[%s2 + $0x170] sm:$0xf]
    %v150 = vld [vmem:[%s2 + $0x174] sm:$0xf]
    %v151 = vld [vmem:[%s2 + $0x178] sm:$0xf]
    %v152 = vld [vmem:[%s2 + $0x17c] sm:$0xf]
    %v153 = vld [vmem:[%s2 + $0x180] sm:$0xf]
    %v154 = vld [vmem:[%s2 + $0x184] sm:$0xf]
    %v155 = vld [vmem:[%s2 + $0x188] sm:$0xf]
    %v156 = vld [vmem:[%s2 + $0x18c] sm:$0xf]
    %v157 = vld [vmem:[%s2 + $0x190] sm:$0xf]
    %v158 = vld [vmem:[%s2 + $0x194] sm:$0xf]
    %v159 = vld [vmem:[%s2 + $0x198] sm:$0xf]
    %v160 = vld [vmem:[%s2 + $0x19c] sm:$0xf]
    %v161 = vld [vmem:[%s2 + $0x1a0] sm:$0xf]
    %v162 = vld [vmem:[%s2 + $0x1a4] sm:$0xf]
    %v163 = vld [vmem:[%s2 + $0x1a8] sm:$0xf]
    %v164 = vld [vmem:[%s2 + $0x1ac] sm:$0xf]
    %v165 = vld [vmem:[%s2 + $0x1b0] sm:$0xf]
    %v166 = vld [vmem:[%s2 + $0x1b4] sm:$0xf]
    %v167 = vld [vmem:[%s2 + $0x1b8] sm:$0xf]
    %v168 = vld [vmem:[%s2 + $0x1bc] sm:$0xf]
    %v169 = vld [vmem:[%s2 + $0x1c0] sm:$0xf]
    %v170 = vld [vmem:[%s2 + $0x1c4] sm:$0xf]
    %v171 = vld [vmem:[%s2 + $0x1c8] sm:$0xf]
    %v172 = vld [vmem:[%s2 + $0x1cc] sm:$0xf]
    %v173 = vld [vmem:[%s2 + $0x1d0] sm:$0xf]
    %v174 = vld [vmem:[%s2 + $0x1d4] sm:$0xf]
    %v175 = vld [vmem:[%s2 + $0x1d8] sm:$0xf]
    %v176 = vld [vmem:[%s2 + $0x1dc] sm:$0xf]
    %v177 = vld [vmem:[%s2 + $0x1e0] sm:$0xf]
    %v178 = vld [vmem:[%s2 + $0x1e4] sm:$0xf]
    %v179 = vld [vmem:[%s2 + $0x1e8] sm:$0xf]
    %v180 = vld [vmem:[%s2 + $0x1ec] sm:$0xf]
    %v181 = vld [vmem:[%s2 + $0x1f0] sm:$0xf]
    %v182 = vld [vmem:[%s2 + $0x1f4] sm:$0xf]
    %v183 = vld [vmem:[%s2 + $0x1f8] sm:$0xf]
    %v184 = vld [vmem:[%s2 + $0x1fc] sm:$0xf]
    %v185 = vld [vmem:[%s3] sm:$0x1]
    %v187 = vperm.slane %v185, 0
    %v317 = vunpack.c.l.b16 %v57
    %v318 = vunpack.c.l.b16 %v58
    %v319 = vunpack.c.l.b16 %v59
    %v320 = vunpack.c.l.b16 %v60
    %v321 = vunpack.c.l.b16 %v61
    %v322 = vunpack.c.l.b16 %v62
    %v323 = vunpack.c.l.b16 %v63
    %v324 = vunpack.c.l.b16 %v64
    %v325 = vunpack.c.l.b16 %v65
    %v326 = vunpack.c.l.b16 %v66
    %v327 = vunpack.c.l.b16 %v67
    %v328 = vunpack.c.l.b16 %v68
    %v329 = vunpack.c.l.b16 %v69
    %v330 = vunpack.c.l.b16 %v70
    %v331 = vunpack.c.l.b16 %v71
    %v332 = vunpack.c.l.b16 %v72
    %v333 = vunpack.c.l.b16 %v73
    %v334 = vunpack.c.l.b16 %v74
    %v335 = vunpack.c.l.b16 %v75
    %v336 = vunpack.c.l.b16 %v76
    %v337 = vunpack.c.l.b16 %v77
    %v338 = vunpack.c.l.b16 %v78
    %v339 = vunpack.c.l.b16 %v79
    %v340 = vunpack.c.l.b16 %v80
    %v341 = vunpack.c.l.b16 %v81
    %v342 = vunpack.c.l.b16 %v82
    %v343 = vunpack.c.l.b16 %v83
    %v344 = vunpack.c.l.b16 %v84
    %v345 = vunpack.c.l.b16 %v85
    %v346 = vunpack.c.l.b16 %v86
    %v347 = vunpack.c.l.b16 %v87
    %v348 = vunpack.c.l.b16 %v88
    %v349 = vunpack.c.l.b16 %v89
    %v350 = vunpack.c.l.b16 %v90
    %v351 = vunpack.c.l.b16 %v91
    %v352 = vunpack.c.l.b16 %v92
    %v353 = vunpack.c.l.b16 %v93
    %v354 = vunpack.c.l.b16 %v94
    %v355 = vunpack.c.l.b16 %v95
    %v356 = vunpack.c.l.b16 %v96
    %v357 = vunpack.c.l.b16 %v97
    %v358 = vunpack.c.l.b16 %v98
    %v359 = vunpack.c.l.b16 %v99
    %v360 = vunpack.c.l.b16 %v100
    %v361 = vunpack.c.l.b16 %v101
    %v362 = vunpack.c.l.b16 %v102
    %v363 = vunpack.c.l.b16 %v103
    %v364 = vunpack.c.l.b16 %v104
    %v365 = vunpack.c.l.b16 %v105
    %v366 = vunpack.c.l.b16 %v106
    %v367 = vunpack.c.l.b16 %v107
    %v368 = vunpack.c.l.b16 %v108
    %v369 = vunpack.c.l.b16 %v109
    %v370 = vunpack.c.l.b16 %v110
    %v371 = vunpack.c.l.b16 %v111
    %v372 = vunpack.c.l.b16 %v112
    %v373 = vunpack.c.l.b16 %v113
    %v374 = vunpack.c.l.b16 %v114
    %v375 = vunpack.c.l.b16 %v115
    %v376 = vunpack.c.l.b16 %v116
    %v377 = vunpack.c.l.b16 %v117
    %v378 = vunpack.c.l.b16 %v118
    %v379 = vunpack.c.l.b16 %v119
    %v380 = vunpack.c.l.b16 %v120
    %v381 = vunpack.c.l.b16 %v121
    %v382 = vunpack.c.l.b16 %v122
    %v383 = vunpack.c.l.b16 %v123
    %v384 = vunpack.c.l.b16 %v124
    %v385 = vunpack.c.l.b16 %v125
    %v386 = vunpack.c.l.b16 %v126
    %v387 = vunpack.c.l.b16 %v127
    %v388 = vunpack.c.l.b16 %v128
    %v389 = vunpack.c.l.b16 %v129
    %v390 = vunpack.c.l.b16 %v130
    %v391 = vunpack.c.l.b16 %v131
    %v392 = vunpack.c.l.b16 %v132
    %v393 = vunpack.c.l.b16 %v133
    %v394 = vunpack.c.l.b16 %v134
    %v395 = vunpack.c.l.b16 %v135
    %v396 = vunpack.c.l.b16 %v136
    %v397 = vunpack.c.l.b16 %v137
    %v398 = vunpack.c.l.b16 %v138
    %v399 = vunpack.c.l.b16 %v139
    %v400 = vunpack.c.l.b16 %v140
    %v401 = vunpack.c.l.b16 %v141
    %v402 = vunpack.c.l.b16 %v142
    %v403 = vunpack.c.l.b16 %v143
    %v404 = vunpack.c.l.b16 %v144
    %v405 = vunpack.c.l.b16 %v145
    %v406 = vunpack.c.l.b16 %v146
    %v407 = vunpack.c.l.b16 %v147
    %v408 = vunpack.c.l.b16 %v148
    %v409 = vunpack.c.l.b16 %v149
    %v410 = vunpack.c.l.b16 %v150
    %v411 = vunpack.c.l.b16 %v151
    %v412 = vunpack.c.l.b16 %v152
    %v413 = vunpack.c.l.b16 %v153
    %v414 = vunpack.c.l.b16 %v154
    %v415 = vunpack.c.l.b16 %v155
    %v416 = vunpack.c.l.b16 %v156
    %v417 = vunpack.c.l.b16 %v157
    %v418 = vunpack.c.l.b16 %v158
    %v419 = vunpack.c.l.b16 %v159
    %v420 = vunpack.c.l.b16 %v160
    %v421 = vunpack.c.l.b16 %v161
    %v422 = vunpack.c.l.b16 %v162
    %v423 = vunpack.c.l.b16 %v163
    %v424 = vunpack.c.l.b16 %v164
    %v425 = vunpack.c.l.b16 %v165
    %v426 = vunpack.c.l.b16 %v166
    %v427 = vunpack.c.l.b16 %v167
    %v428 = vunpack.c.l.b16 %v168
    %v429 = vunpack.c.l.b16 %v169
    %v430 = vunpack.c.l.b16 %v170
    %v431 = vunpack.c.l.b16 %v171
    %v432 = vunpack.c.l.b16 %v172
    %v433 = vunpack.c.l.b16 %v173
    %v434 = vunpack.c.l.b16 %v174
    %v435 = vunpack.c.l.b16 %v175
    %v436 = vunpack.c.l.b16 %v176
    %v437 = vunpack.c.l.b16 %v177
    %v438 = vunpack.c.l.b16 %v178
    %v439 = vunpack.c.l.b16 %v179
    %v440 = vunpack.c.l.b16 %v180
    %v441 = vunpack.c.l.b16 %v181
    %v442 = vunpack.c.l.b16 %v182
    %v443 = vunpack.c.l.b16 %v183
    %v444 = vunpack.c.l.b16 %v184
    %v445 = vpack.c.b16 %v318, %v317
    %v446 = vpack.c.b16 %v320, %v319
    %v447 = vpack.c.b16 %v322, %v321
    %v448 = vpack.c.b16 %v324, %v323
    %v449 = vpack.c.b16 %v326, %v325
    %v450 = vpack.c.b16 %v328, %v327
    %v451 = vpack.c.b16 %v330, %v329
    %v452 = vpack.c.b16 %v332, %v331
    %v453 = vpack.c.b16 %v334, %v333
    %v454 = vpack.c.b16 %v336, %v335
    %v455 = vpack.c.b16 %v338, %v337
    %v456 = vpack.c.b16 %v340, %v339
    %v457 = vpack.c.b16 %v342, %v341
    %v458 = vpack.c.b16 %v344, %v343
    %v459 = vpack.c.b16 %v346, %v345
    %v460 = vpack.c.b16 %v348, %v347
    %v461 = vpack.c.b16 %v350, %v349
    %v462 = vpack.c.b16 %v352, %v351
    %v463 = vpack.c.b16 %v354, %v353
    %v464 = vpack.c.b16 %v356, %v355
    %v465 = vpack.c.b16 %v358, %v357
    %v466 = vpack.c.b16 %v360, %v359
    %v467 = vpack.c.b16 %v362, %v361
    %v468 = vpack.c.b16 %v364, %v363
    %v469 = vpack.c.b16 %v366, %v365
    %v470 = vpack.c.b16 %v368, %v367
    %v471 = vpack.c.b16 %v370, %v369
    %v472 = vpack.c.b16 %v372, %v371
    %v473 = vpack.c.b16 %v374, %v373
    %v474 = vpack.c.b16 %v376, %v375
    %v475 = vpack.c.b16 %v378, %v377
    %v476 = vpack.c.b16 %v380, %v379
    %v477 = vpack.c.b16 %v382, %v381
    %v478 = vpack.c.b16 %v384, %v383
    %v479 = vpack.c.b16 %v386, %v385
    %v480 = vpack.c.b16 %v388, %v387
    %v481 = vpack.c.b16 %v390, %v389
    %v482 = vpack.c.b16 %v392, %v391
    %v483 = vpack.c.b16 %v394, %v393
    %v484 = vpack.c.b16 %v396, %v395
    %v485 = vpack.c.b16 %v398, %v397
    %v486 = vpack.c.b16 %v400, %v399
    %v487 = vpack.c.b16 %v402, %v401
    %v488 = vpack.c.b16 %v404, %v403
    %v489 = vpack.c.b16 %v406, %v405
    %v490 = vpack.c.b16 %v408, %v407
    %v491 = vpack.c.b16 %v410, %v409
    %v492 = vpack.c.b16 %v412, %v411
    %v493 = vpack.c.b16 %v414, %v413
    %v494 = vpack.c.b16 %v416, %v415
    %v495 = vpack.c.b16 %v418, %v417
    %v496 = vpack.c.b16 %v420, %v419
    %v497 = vpack.c.b16 %v422, %v421
    %v498 = vpack.c.b16 %v424, %v423
    %v499 = vpack.c.b16 %v426, %v425
    %v500 = vpack.c.b16 %v428, %v427
    %v501 = vpack.c.b16 %v430, %v429
    %v502 = vpack.c.b16 %v432, %v431
    %v503 = vpack.c.b16 %v434, %v433
    %v504 = vpack.c.b16 %v436, %v435
    %v505 = vpack.c.b16 %v438, %v437
    %v506 = vpack.c.b16 %v440, %v439
    %v507 = vpack.c.b16 %v442, %v441
    %v508 = vpack.c.b16 %v444, %v443
    %573 = vmatpush.bf16.msra.mxu0 %v452
    %574 = vmatpush.bf16.msra.mxu0 %v451
    %575 = vmatpush.bf16.msra.mxu0 %v450
    %576 = vmatpush.bf16.msra.mxu0 %v449
    %577 = vmatpush.bf16.msra.mxu0 %v448
    %578 = vmatpush.bf16.msra.mxu0 %v447
    %579 = vmatpush.bf16.msra.mxu0 %v446
    %580 = vmatpush.bf16.msra.mxu0 %v445
    %581 = vmatmul.bf16.gmra.mxu0 %v49
    %v582 = vpop.f32.mrf.mxu0
    %v583 = vadd.f32 %v187, %v582
    %v584 = vpop.f32.mrf.mxu0
    %585 = vdwg.mxu0
    %586 = vmatpush.bf16.msra.mxu0 %v460
    %587 = vmatpush.bf16.msra.mxu0 %v459
    %588 = vmatpush.bf16.msra.mxu0 %v458
    %589 = vmatpush.bf16.msra.mxu0 %v457
    %590 = vmatpush.bf16.msra.mxu0 %v456
    %591 = vmatpush.bf16.msra.mxu0 %v455
    %592 = vmatpush.bf16.msra.mxu0 %v454
    %593 = vmatpush.bf16.msra.mxu0 %v453
    %594 = vmatmul.bf16.gmra.mxu0 %v50
    %v595 = vpop.f32.mrf.mxu0
    %v596 = vadd.f32 %v583, %v595
    %v597 = vpop.f32.mrf.mxu0
    %598 = vdwg.mxu0
    %599 = vmatpush.bf16.msra.mxu0 %v468
    %600 = vmatpush.bf16.msra.mxu0 %v467
    %601 = vmatpush.bf16.msra.mxu0 %v466
    %602 = vmatpush.bf16.msra.mxu0 %v465
    %603 = vmatpush.bf16.msra.mxu0 %v464
    %604 = vmatpush.bf16.msra.mxu0 %v463
    %605 = vmatpush.bf16.msra.mxu0 %v462
    %606 = vmatpush.bf16.msra.mxu0 %v461
    %607 = vmatmul.bf16.gmra.mxu0 %v51
    %v608 = vpop.f32.mrf.mxu0
    %v609 = vadd.f32 %v596, %v608
    %v610 = vpop.f32.mrf.mxu0
    %611 = vdwg.mxu0
    %612 = vmatpush.bf16.msra.mxu0 %v476
    %613 = vmatpush.bf16.msra.mxu0 %v475
    %614 = vmatpush.bf16.msra.mxu0 %v474
    %615 = vmatpush.bf16.msra.mxu0 %v473
    %616 = vmatpush.bf16.msra.mxu0 %v472
    %617 = vmatpush.bf16.msra.mxu0 %v471
    %618 = vmatpush.bf16.msra.mxu0 %v470
    %619 = vmatpush.bf16.msra.mxu0 %v469
    %620 = vmatmul.bf16.gmra.mxu0 %v52
    %v621 = vpop.f32.mrf.mxu0
    %v622 = vadd.f32 %v609, %v621
    %v623 = vpop.f32.mrf.mxu0
    %624 = vdwg.mxu0
    %625 = vmatpush.bf16.msra.mxu0 %v484
    %626 = vmatpush.bf16.msra.mxu0 %v483
    %627 = vmatpush.bf16.msra.mxu0 %v482
    %628 = vmatpush.bf16.msra.mxu0 %v481
    %629 = vmatpush.bf16.msra.mxu0 %v480
    %630 = vmatpush.bf16.msra.mxu0 %v479
    %631 = vmatpush.bf16.msra.mxu0 %v478
    %632 = vmatpush.bf16.msra.mxu0 %v477
    %633 = vmatmul.bf16.gmra.mxu0 %v53
    %v634 = vpop.f32.mrf.mxu0
    %v635 = vadd.f32 %v622, %v634
    %v636 = vpop.f32.mrf.mxu0
    %637 = vdwg.mxu0
    %638 = vmatpush.bf16.msra.mxu0 %v492
    %639 = vmatpush.bf16.msra.mxu0 %v491
    %640 = vmatpush.bf16.msra.mxu0 %v490
    %641 = vmatpush.bf16.msra.mxu0 %v489
    %642 = vmatpush.bf16.msra.mxu0 %v488
    %643 = vmatpush.bf16.msra.mxu0 %v487
    %644 = vmatpush.bf16.msra.mxu0 %v486
    %645 = vmatpush.bf16.msra.mxu0 %v485
    %646 = vmatmul.bf16.gmra.mxu0 %v54
    %v647 = vpop.f32.mrf.mxu0
    %v648 = vadd.f32 %v635, %v647
    %v649 = vpop.f32.mrf.mxu0
    %650 = vdwg.mxu0
    %651 = vmatpush.bf16.msra.mxu0 %v500
    %652 = vmatpush.bf16.msra.mxu0 %v499
    %653 = vmatpush.bf16.msra.mxu0 %v498
    %654 = vmatpush.bf16.msra.mxu0 %v497
    %655 = vmatpush.bf16.msra.mxu0 %v496
    %656 = vmatpush.bf16.msra.mxu0 %v495
    %657 = vmatpush.bf16.msra.mxu0 %v494
    %658 = vmatpush.bf16.msra.mxu0 %v493
    %659 = vmatmul.bf16.gmra.mxu0 %v55
    %v660 = vpop.f32.mrf.mxu0
    %v661 = vadd.f32 %v648, %v660
    %v662 = vpop.f32.mrf.mxu0
    %663 = vdwg.mxu0
    %664 = vmatpush.bf16.msra.mxu0 %v508
    %665 = vmatpush.bf16.msra.mxu0 %v507
    %666 = vmatpush.bf16.msra.mxu0 %v506
    %667 = vmatpush.bf16.msra.mxu0 %v505
    %668 = vmatpush.bf16.msra.mxu0 %v504
    %669 = vmatpush.bf16.msra.mxu0 %v503
    %670 = vmatpush.bf16.msra.mxu0 %v502
    %671 = vmatpush.bf16.msra.mxu0 %v501
    %672 = vmatmul.bf16.gmra.mxu0 %v56
    %v673 = vpop.f32.mrf.mxu0
    %v674 = vadd.f32 %v661, %v673
    %v675 = vpop.f32.mrf.mxu0
    %676 = vdwg.mxu0
    %s677 = sld [smem:[#allocation2]]
    %vm678 = vcmp.gt.f32.partialorder %v674, 0.0
    %v679 = vstv %s677
    %v680 = vmul.f32 %v679, %v674
    %v681 = vsel %vm678, %v674, %v680
    %v682 = vpack.c.bf16 %v681, %v681
    %v683 = vld [vmem:[%s4] sm:$0xf]
    %v684 = vld [vmem:[%s4 + $0x4] sm:$0xf]
    %v685 = vld [vmem:[%s4 + $0x8] sm:$0xf]
    %v686 = vld [vmem:[%s4 + $0xc] sm:$0xf]
    %v687 = vld [vmem:[%s5] sm:$0x1]
    %v689 = vperm.slane %v687, 0
    %v695 = vunpack.c.l.b16 %v683
    %v696 = vunpack.c.l.b16 %v684
    %v697 = vunpack.c.l.b16 %v685
    %v698 = vunpack.c.l.b16 %v686
    %v699 = vpack.c.b16 %v696, %v695
    %v700 = vpack.c.b16 %v698, %v697
    %vm703 = vcmask 261120
    %v705 = vsel %vm703, %v682, 0
    %707 = vmatpush.bf16.msra.mxu0 0
    %708 = vmatpush.bf16.msra.mxu0 0
    %709 = vmatpush.bf16.msra.mxu0 0
    %710 = vmatpush.bf16.msra.mxu0 0
    %711 = vmatpush.bf16.msra.mxu0 0
    %712 = vmatpush.bf16.msra.mxu0 0
    %713 = vmatpush.bf16.msra.mxu0 %v700
    %714 = vmatpush.bf16.msra.mxu0 %v699
    %715 = vmatmul.bf16.gmra.mxu0 %v705
    %v716 = vpop.f32.mrf.mxu0
    %v717 = vadd.f32 %v689, %v716
    %v718 = vpop.f32.mrf.mxu0
    %719 = vdwg.mxu0
    %vm720 = vcmask 17408
    %v721 = vsel %vm720, %v717, -inf
    %722 = vmax.xlane.f32.xlu0 %v721
    %v723 = vpop.xlane.xlu0 %722
    %v724 = vsub.f32 %v717, %v723
    %v725 = vmul.f32 %v724, 1.442695
    %v726 = vpow.pop %v725
    %v727 = vsel %vm720, %v726, 0.0
    %728 = vadd.xlane.f32.xlu0 %v727
    %v729 = vpop.xlane.xlu0 %728
    %v730 = vlog2.pop %v729
    %v731 = vmul.f32 %v730, 0.6931472
    %v732 = vsub.f32 %v724, %v731
    %733 = vst.msk [vmem:[#allocation3] sm:$0x3] %vm720, %v732
    // Predicated region
    $region26: #{tpu_custom_call.1} parent=1 // pred_check
      _
    $region27: #{tpu_custom_call.1} parent=1 // pred_check_branch
      %735 = sbr.rel (0) target = $region29
    $region28: #{tpu_custom_call.1} parent=1 // pred_region
      %737 = vsyncadd [#allocation4], 0
      %s739 = sshll.u32 [#allocation3], 4
      %s740 = int_to_ptr.vmem [resolvable:$true] %s739
      %s741 = sshll.u32 %s6, 4
      %s742 = int_to_ptr.hbm [resolvable:$true] %s741
      %744 = dma.vmem_to_hbm [thread:$0]  %s740, 32, %s742, [#allocation4]
    $region29: #{tpu_custom_call.1} parent=1 // pred_fallthru
      _
    // Predicated region
    $region30: #{tpu_custom_call.1} parent=1 // pred_check
      _
    $region31: #{tpu_custom_call.1} parent=1 // pred_check_branch
      %746 = sbr.rel (0) target = $region33
    $region32: #{tpu_custom_call.1} parent=1 // pred_region
      %748 = dma.done [#allocation4], 32
    $region33: #{tpu_custom_call.1} parent=1 // pred_fallthru
      _
    %749 = vsyncpa [#allocation4], 1

</llo_original>
